<compile_context>
chip_gen: v7x
topology: tpu7x:2x2x1
jax: 0.10.0
libtpu: 0.0.40
codegen_flags: <defaults>
</compile_context>

<pallas_src>
import functools
from typing import NamedTuple

import jax
import jax.numpy as jnp
from jax import lax
from jax.experimental import pallas as pl
from jax.experimental.pallas import tpu as pltpu


def _round_up(n: int, m: int) -> int:
    return ((n + m - 1) // m) * m


class EmoNetConfig(NamedTuple):
    V: int
    E: int
    H: int
    C: int
    Ep: int
    Hp: int
    Cp: int
    tile_v: int
    num_v: int


def pack_emonet_params(emb, w1, b1, w2, b2, *, tile_v=2048,
                       param_dtype=jnp.bfloat16):
    """One-time packing: pad / transpose / cast parameters for the kernel.

    emb:(V,E)  w1:(H,E)  b1:(H,)  w2:(C,H)  b2:(C,)
    Returns (params dict of device arrays, static EmoNetConfig).
    """
    V, E = emb.shape
    H = w1.shape[0]
    C = w2.shape[0]

    Ep = _round_up(E, 128)
    Hp = _round_up(H, 128)
    Cp = _round_up(C, 128)
    tile_v = min(tile_v, _round_up(V, 128))
    Vp = _round_up(V, tile_v)
    num_v = Vp // tile_v

    # Padded vocab rows / weight rows-cols / biases are zero, so padded lanes
    # contribute exactly zero.  One extra all-zero "sentinel" vocab tile (block
    # index == num_v) backs the unused grid slots of the touched-tile schedule.
    embp = jnp.pad(emb.astype(param_dtype),
                   ((0, Vp + tile_v - V), (0, Ep - E)))
    w1tp = jnp.pad(w1.T.astype(param_dtype), ((0, Ep - E), (0, Hp - H)))
    b1p = jnp.pad(b1.astype(jnp.float32), (0, Hp - H)).reshape(1, Hp)
    w2tp = jnp.pad(w2.T.astype(param_dtype), ((0, Hp - H), (0, Cp - C)))
    b2p = jnp.pad(b2.astype(jnp.float32), (0, Cp - C)).reshape(1, Cp)

    params = dict(emb=embp, w1=w1tp, b1=b1p, w2=w2tp, b2=b2p)
    cfg = EmoNetConfig(V=V, E=E, H=H, C=C, Ep=Ep, Hp=Hp, Cp=Cp,
                       tile_v=tile_v, num_v=num_v)
    return params, cfg


def _emonet_kernel(tids_ref, x_ref, emb_ref, w1_ref, b1_ref, w2_ref, b2_ref,
                   out_ref, acc_ref, *, sub):
    # tids_ref: (n_steps,) int32 in SMEM  (scalar-prefetched touched tile ids)
    # x_ref:    (tile_b, T)   int32 token ids (resident per batch block)
    # emb_ref:  (tile_v, Ep)  bf16 embedding tile for this grid step
    # w1_ref:   (Ep, Hp) bf16, b1_ref: (1, Hp) f32
    # w2_ref:   (Hp, Cp) bf16, b2_ref: (1, Cp) f32
    # out_ref:  (tile_b, Cp)  f32 (resident across the vocab axis)
    # acc_ref:  (tile_b, Ep)  f32 scratch accumulator for sum_t embedding(x)
    v = pl.program_id(1)
    nv = pl.num_programs(1)

    @pl.when(v == 0)
    def _init():
        acc_ref[...] = jnp.zeros_like(acc_ref)

    idx = x_ref[...]                          # (tile_b, T) int32
    tile_b, T = idx.shape
    tile_v = emb_ref.shape[0]
    n_sub = tile_v // sub

    # First vocab id of this (data-selected) tile.  Sentinel tiles have
    # base >= V, so no token matches and they contribute exactly zero.
    base = tids_ref[v] * tile_v

    # counts <= T, so the bf16 cast is exact for T <= 256; otherwise keep f32.
    lhs_dtype = emb_ref.dtype if T <= 256 else jnp.float32

    def sub_chunk(c, carry):
        off = pl.multiple_of(c * sub, sub)
        lane_ids = base + off + lax.broadcasted_iota(jnp.int32, (1, sub), 1)
        counts = jnp.zeros((tile_b, sub), jnp.int32)
        for t in range(T):                    # T is small & static
            counts = counts + (idx[:, t:t + 1] == lane_ids).astype(jnp.int32)
        acc_ref[...] += jnp.dot(counts.astype(lhs_dtype),
                                emb_ref[pl.ds(off, sub), :],
                                preferred_element_type=jnp.float32)
        return carry

    lax.fori_loop(0, n_sub, sub_chunk, 0)

    @pl.when(v == nv - 1)
    def _finalize():
        mean_emb = acc_ref[...] * (1.0 / T)                        # (tile_b, Ep)
        h = jnp.dot(mean_emb.astype(w1_ref.dtype), w1_ref[...],
                    preferred_element_type=jnp.float32) + b1_ref[...]
        h = jnp.maximum(h, 0.0)                                    # f32 ReLU
        out_ref[...] = jnp.dot(h.astype(w2_ref.dtype), w2_ref[...],
                               preferred_element_type=jnp.float32) + b2_ref[...]


def emonet_forward(x, params, cfg, *, tile_b=128):
    """EmoNet forward with pre-packed params.  x:(B,T) int -> (B, C) f32."""
    B, T = x.shape
    Ep, Hp, Cp = cfg.Ep, cfg.Hp, cfg.Cp
    tile_v, num_v = cfg.tile_v, cfg.num_v

    tile_b = min(tile_b, _round_up(B, 8))
    Bp = _round_up(B, tile_b)
    num_b = Bp // tile_b

    # Sub-chunk width for the counts build: keep (tile_b, sub) int32 within
    # ~16 vregs and make it a divisor of tile_v.
    sub = max(128, min(tile_v, (16384 // tile_b) // 128 * 128))
    while tile_v % sub:
        sub -= 128

    xp = jnp.pad(x.astype(jnp.int32), ((0, Bp - B), (0, 0)))

    # Data-dependent tile schedule: only visit vocab tiles touched by x.
    # Unused slots get the sentinel tile id `num_v` (all-zero rows, no matches).
    n_steps = min(num_v, B * T)
    tids = jnp.unique(x.reshape(-1).astype(jnp.int32) // tile_v,
                      size=n_steps, fill_value=num_v).astype(jnp.int32)

    itemsize = jnp.dtype(params["emb"].dtype).itemsize
    vmem_est = (2 * tile_v * Ep * itemsize            # streamed emb, double-buf
                + 2 * (Ep * Hp + Hp * Cp) * itemsize  # resident weights (worst)
                + 2 * (Hp + Cp) * 4                   # biases
                + 2 * tile_b * T * 4                  # x block
                + 2 * tile_b * Cp * 4                 # out block
                + tile_b * Ep * 4)                    # f32 accumulator scratch
    vmem_limit = None
    if vmem_est > 12 * (1 << 20):
        vmem_limit = min(64 * (1 << 20), int(vmem_est * 1.5))

    kernel = functools.partial(_emonet_kernel, sub=sub)

    out_padded = pl.pallas_call(
        kernel,
        out_shape=jax.ShapeDtypeStruct((Bp, Cp), jnp.float32),
        grid_spec=pltpu.PrefetchScalarGridSpec(
            num_scalar_prefetch=1,
            grid=(num_b, n_steps),
            in_specs=[
                pl.BlockSpec((tile_b, T), lambda b, v, tids: (b, 0)),      # x
                pl.BlockSpec((tile_v, Ep),
                             lambda b, v, tids: (tids[v], 0)),             # emb
                pl.BlockSpec((Ep, Hp), lambda b, v, tids: (0, 0)),         # w1^T
                pl.BlockSpec((1, Hp), lambda b, v, tids: (0, 0)),          # b1
                pl.BlockSpec((Hp, Cp), lambda b, v, tids: (0, 0)),         # w2^T
                pl.BlockSpec((1, Cp), lambda b, v, tids: (0, 0)),          # b2
            ],
            out_specs=pl.BlockSpec((tile_b, Cp), lambda b, v, tids: (b, 0)),
            scratch_shapes=[pltpu.VMEM((tile_b, Ep), jnp.float32)],
        ),
        compiler_params=pltpu.CompilerParams(
            dimension_semantics=("parallel", "arbitrary"),
            vmem_limit_bytes=vmem_limit),
    )(tids, xp, params["emb"], params["w1"], params["b1"],
      params["w2"], params["b2"])

    return out_padded[:B, :cfg.C]


def emonet_reference(x, emb, w1, b1, w2, b2):
    # Pure-JAX f32 reference mirroring the PyTorch forward.
    e = jnp.take(emb, x, axis=0)          # (B, T, E)
    m = e.mean(axis=1)                    # (B, E)
    h = jnp.maximum(m @ w1.T + b1, 0.0)   # (B, H)
    return h @ w2.T + b2                  # (B, C)


if __name__ == "__main__":
    # Small, forward-consistent shapes.
    vocab_size, num_classes = 32, 8
    embed_dim, hidden_dim = 32, 64
    B, T = 4, 8

    key = jax.random.PRNGKey(0)
    k_emb, k_w1, k_b1, k_w2, k_b2, k_x = jax.random.split(key, 6)

    emb = jax.random.normal(k_emb, (vocab_size, embed_dim), jnp.float32)
    w1 = jax.random.uniform(k_w1, (hidden_dim, embed_dim), jnp.float32,
                            minval=-1.0, maxval=1.0) / jnp.sqrt(embed_dim)
    b1 = jax.random.uniform(k_b1, (hidden_dim,), jnp.float32,
                            minval=-1.0, maxval=1.0) / jnp.sqrt(embed_dim)
    w2 = jax.random.uniform(k_w2, (num_classes, hidden_dim), jnp.float32,
                            minval=-1.0, maxval=1.0) / jnp.sqrt(hidden_dim)
    b2 = jax.random.uniform(k_b2, (num_classes,), jnp.float32,
                            minval=-1.0, maxval=1.0) / jnp.sqrt(hidden_dim)

    x = jax.random.randint(k_x, (B, T), 0, vocab_size, dtype=jnp.int32)

    # One-time packing (hoisted out of the per-call path), then jit the forward.
    params, cfg = pack_emonet_params(emb, w1, b1, w2, b2, tile_v=2048)
    fwd = jax.jit(emonet_forward, static_argnums=(2,))

    out = fwd(x, params, cfg)
    out = jax.block_until_ready(out)

    ref = emonet_reference(x, emb, w1, b1, w2, b2)
    assert out.shape == (B, num_classes)
    # bf16 params on the MXU path -> compare against the f32 reference with a
    # tolerance that comfortably covers bf16 rounding at these magnitudes.
    assert jnp.allclose(out, ref, atol=2e-2, rtol=2e-2), "mismatch vs reference"

    print("KERNEL_OK")
</pallas_src>

<mosaic_0001>
module attributes {stable_mosaic.version = 11 : i64} {
  func.func private @main(%arg0: i32) attributes {dimension_semantics = [#tpu.dimension_semantics<core_parallel>], iteration_bounds = array<i64: 2>, tpu.core_type = #tpu.core_type<sc_scalar_subcore>, window_params = []} {
    return
  }
}

module attributes {stable_mosaic.version = 11 : i64} {
  func.func private @main(%arg0: i32) attributes {dimension_semantics = [#tpu.dimension_semantics<core_parallel>], iteration_bounds = array<i64: 2>, tpu.core_type = #tpu.core_type<sc_scalar_subcore>, window_params = []} {
    return
  }
}

module attributes {stable_mosaic.version = 11 : i64} {
  func.func @_emonet_kernel(%arg0: i32, %arg1: i32, %arg2: memref<1xi32, #tpu.memory_space<smem>>, %arg3: memref<8x8xi32, #tpu.memory_space<vmem>>, %arg4: memref<128x128xbf16, #tpu.memory_space<vmem>>, %arg5: memref<128x128xbf16, #tpu.memory_space<vmem>>, %arg6: memref<1x128xf32, #tpu.memory_space<vmem>>, %arg7: memref<128x128xbf16, #tpu.memory_space<vmem>>, %arg8: memref<1x128xf32, #tpu.memory_space<vmem>>, %arg9: memref<8x128xf32, #tpu.memory_space<vmem>>, %arg10: memref<8x128xf32, #tpu.memory_space<vmem>>) attributes {dimension_semantics = [#tpu.dimension_semantics<parallel>, #tpu.dimension_semantics<arbitrary>], iteration_bounds = array<i64: 1, 1>, scalar_prefetch = 1 : i64, scratch_operands = 1 : i64, tpu.core_type = #tpu.core_type<tc>, window_params = [{transform_indices = @transform_0, window_bounds = array<i64: 8, 8>}, {transform_indices = @transform_1, window_bounds = array<i64: 128, 128>}, {pipeline_mode = #tpu.pipeline_mode<synchronous>, transform_indices = @transform_2, window_bounds = array<i64: 128, 128>}, {pipeline_mode = #tpu.pipeline_mode<synchronous>, transform_indices = @transform_3, window_bounds = array<i64: 1, 128>}, {pipeline_mode = #tpu.pipeline_mode<synchronous>, transform_indices = @transform_4, window_bounds = array<i64: 128, 128>}, {pipeline_mode = #tpu.pipeline_mode<synchronous>, transform_indices = @transform_5, window_bounds = array<i64: 1, 128>}, {transform_indices = @transform_6, window_bounds = array<i64: 8, 128>}]} {
    %c0_i32 = arith.constant 0 : i32
    %0 = arith.cmpi eq, %arg1, %c0_i32 : i32
    %1 = arith.extui %0 : i1 to i32
    %c0_i32_0 = arith.constant 0 : i32
    %2 = arith.cmpi ne, %1, %c0_i32_0 : i32
    scf.if %2 {
      %cst_12 = arith.constant 0.000000e+00 : f32
      %72 = vector.broadcast %cst_12 : f32 to vector<8x128xf32>
      %c0_13 = arith.constant 0 : index
      %c0_14 = arith.constant 0 : index
      %73 = vector.load %arg10[%c0_13, %c0_14] : memref<8x128xf32, #tpu.memory_space<vmem>>, vector<8x128xf32>
      tpu.vector_store %arg10[%c0_13, %c0_14], %72 {strides = array<i32>} : memref<8x128xf32, #tpu.memory_space<vmem>>, vector<8x128xf32>,
    } else {
    }
    %c0 = arith.constant 0 : index
    %c0_1 = arith.constant 0 : index
    %3 = vector.load %arg3[%c0, %c0_1] : memref<8x8xi32, #tpu.memory_space<vmem>>, vector<8x8xi32>
    %4 = arith.index_cast %arg1 : i32 to index
    %5 = memref.load %arg2[%4] : memref<1xi32, #tpu.memory_space<smem>>
    %c128_i32 = arith.constant 128 : i32
    %6 = arith.muli %5, %c128_i32 : i32
    %c0_i32_2 = arith.constant 0 : i32
    %c128_i32_3 = arith.constant 128 : i32
    %7 = arith.muli %c0_i32_2, %c128_i32_3 : i32
    %8 = tpu.assume_multiple %7, 128 : i32
    %9 = arith.addi %6, %8 : i32
    %10 = tpu.iota {dimensions = array<i32: 1>} : vector<1x128xi32>
    %11 = vector.broadcast %9 : i32 to vector<1x128xi32>
    %12 = arith.addi %11, %10 : vector<1x128xi32>
    %c0_i32_4 = arith.constant 0 : i32
    %13 = vector.broadcast %c0_i32_4 : i32 to vector<8x128xi32>
    %14 = vector.extract_strided_slice %3 {offsets = [0, 0], sizes = [8, 1], strides = [1, 1]} : vector<8x8xi32> to vector<8x1xi32>
    %15 = vector.broadcast %14 : vector<8x1xi32> to vector<8x128xi32>
    %16 = vector.broadcast %12 : vector<1x128xi32> to vector<8x128xi32>
    %17 = arith.cmpi eq, %15, %16 : vector<8x128xi32>
    %18 = arith.extui %17 : vector<8x128xi1> to vector<8x128xi32>
    %19 = arith.addi %13, %18 : vector<8x128xi32>
    %20 = vector.extract_strided_slice %3 {offsets = [0, 1], sizes = [8, 1], strides = [1, 1]} : vector<8x8xi32> to vector<8x1xi32>
    %21 = vector.broadcast %20 : vector<8x1xi32> to vector<8x128xi32>
    %22 = vector.broadcast %12 : vector<1x128xi32> to vector<8x128xi32>
    %23 = arith.cmpi eq, %21, %22 : vector<8x128xi32>
    %24 = arith.extui %23 : vector<8x128xi1> to vector<8x128xi32>
    %25 = arith.addi %19, %24 : vector<8x128xi32>
    %26 = vector.extract_strided_slice %3 {offsets = [0, 2], sizes = [8, 1], strides = [1, 1]} : vector<8x8xi32> to vector<8x1xi32>
    %27 = vector.broadcast %26 : vector<8x1xi32> to vector<8x128xi32>
    %28 = vector.broadcast %12 : vector<1x128xi32> to vector<8x128xi32>
    %29 = arith.cmpi eq, %27, %28 : vector<8x128xi32>
    %30 = arith.extui %29 : vector<8x128xi1> to vector<8x128xi32>
    %31 = arith.addi %25, %30 : vector<8x128xi32>
    %32 = vector.extract_strided_slice %3 {offsets = [0, 3], sizes = [8, 1], strides = [1, 1]} : vector<8x8xi32> to vector<8x1xi32>
    %33 = vector.broadcast %32 : vector<8x1xi32> to vector<8x128xi32>
    %34 = vector.broadcast %12 : vector<1x128xi32> to vector<8x128xi32>
    %35 = arith.cmpi eq, %33, %34 : vector<8x128xi32>
    %36 = arith.extui %35 : vector<8x128xi1> to vector<8x128xi32>
    %37 = arith.addi %31, %36 : vector<8x128xi32>
    %38 = vector.extract_strided_slice %3 {offsets = [0, 4], sizes = [8, 1], strides = [1, 1]} : vector<8x8xi32> to vector<8x1xi32>
    %39 = vector.broadcast %38 : vector<8x1xi32> to vector<8x128xi32>
    %40 = vector.broadcast %12 : vector<1x128xi32> to vector<8x128xi32>
    %41 = arith.cmpi eq, %39, %40 : vector<8x128xi32>
    %42 = arith.extui %41 : vector<8x128xi1> to vector<8x128xi32>
    %43 = arith.addi %37, %42 : vector<8x128xi32>
    %44 = vector.extract_strided_slice %3 {offsets = [0, 5], sizes = [8, 1], strides = [1, 1]} : vector<8x8xi32> to vector<8x1xi32>
    %45 = vector.broadcast %44 : vector<8x1xi32> to vector<8x128xi32>
    %46 = vector.broadcast %12 : vector<1x128xi32> to vector<8x128xi32>
    %47 = arith.cmpi eq, %45, %46 : vector<8x128xi32>
    %48 = arith.extui %47 : vector<8x128xi1> to vector<8x128xi32>
    %49 = arith.addi %43, %48 : vector<8x128xi32>
    %50 = vector.extract_strided_slice %3 {offsets = [0, 6], sizes = [8, 1], strides = [1, 1]} : vector<8x8xi32> to vector<8x1xi32>
    %51 = vector.broadcast %50 : vector<8x1xi32> to vector<8x128xi32>
    %52 = vector.broadcast %12 : vector<1x128xi32> to vector<8x128xi32>
    %53 = arith.cmpi eq, %51, %52 : vector<8x128xi32>
    %54 = arith.extui %53 : vector<8x128xi1> to vector<8x128xi32>
    %55 = arith.addi %49, %54 : vector<8x128xi32>
    %56 = vector.extract_strided_slice %3 {offsets = [0, 7], sizes = [8, 1], strides = [1, 1]} : vector<8x8xi32> to vector<8x1xi32>
    %57 = vector.broadcast %56 : vector<8x1xi32> to vector<8x128xi32>
    %58 = vector.broadcast %12 : vector<1x128xi32> to vector<8x128xi32>
    %59 = arith.cmpi eq, %57, %58 : vector<8x128xi32>
    %60 = arith.extui %59 : vector<8x128xi1> to vector<8x128xi32>
    %61 = arith.addi %55, %60 : vector<8x128xi32>
    %c0_5 = arith.constant 0 : index
    %c0_6 = arith.constant 0 : index
    %62 = vector.load %arg10[%c0_5, %c0_6] : memref<8x128xf32, #tpu.memory_space<vmem>>, vector<8x128xf32>
    %63 = arith.sitofp %61 : vector<8x128xi32> to vector<8x128xbf16>
    %64 = arith.index_cast %8 : i32 to index
    %c0_7 = arith.constant 0 : index
    %65 = vector.load %arg4[%64, %c0_7] : memref<128x128xbf16, #tpu.memory_space<vmem>>, vector<128x128xbf16>
    %cst = arith.constant dense<0.000000e+00> : vector<8x128xf32>
    %66 = tpu.matmul %63, %65, %cst {dimension_numbers = #tpu.dot_dimension_numbers<[1], [0], [0], [1], [0, 0, 1, 1], [], []>} : vector<8x128xbf16>, vector<128x128xbf16>, vector<8x128xf32> -> vector<8x128xf32>
    %67 = arith.addf %62, %66 : vector<8x128xf32>
    %c0_8 = arith.constant 0 : index
    %c0_9 = arith.constant 0 : index
    %68 = vector.load %arg10[%c0_8, %c0_9] : memref<8x128xf32, #tpu.memory_space<vmem>>, vector<8x128xf32>
    tpu.vector_store %arg10[%c0_8, %c0_9], %67 {strides = array<i32>} : memref<8x128xf32, #tpu.memory_space<vmem>>, vector<8x128xf32>,
    %c1_i32 = arith.constant 1 : i32
    %c0_i32_10 = arith.constant 0 : i32
    %69 = arith.cmpi eq, %arg1, %c0_i32_10 : i32
    %70 = arith.extui %69 : i1 to i32
    %c0_i32_11 = arith.constant 0 : i32
    %71 = arith.cmpi ne, %70, %c0_i32_11 : i32
    scf.if %71 {
      %c0_12 = arith.constant 0 : index
      %c0_13 = arith.constant 0 : index
      %72 = vector.load %arg10[%c0_12, %c0_13] : memref<8x128xf32, #tpu.memory_space<vmem>>, vector<8x128xf32>
      %cst_14 = arith.constant 1.250000e-01 : f32
      %73 = vector.broadcast %cst_14 : f32 to vector<8x128xf32>
      %74 = arith.mulf %72, %73 : vector<8x128xf32>
      %75 = arith.truncf %74 : vector<8x128xf32> to vector<8x128xbf16>
      %c0_15 = arith.constant 0 : index
      %c0_16 = arith.constant 0 : index
      %76 = vector.load %arg5[%c0_15, %c0_16] : memref<128x128xbf16, #tpu.memory_space<vmem>>, vector<128x128xbf16>
      %cst_17 = arith.constant dense<0.000000e+00> : vector<8x128xf32>
      %77 = tpu.matmul %75, %76, %cst_17 {dimension_numbers = #tpu.dot_dimension_numbers<[1], [0], [0], [1], [0, 0, 1, 1], [], []>} : vector<8x128xbf16>, vector<128x128xbf16>, vector<8x128xf32> -> vector<8x128xf32>
      %c0_18 = arith.constant 0 : index
      %c0_19 = arith.constant 0 : index
      %78 = vector.load %arg6[%c0_18, %c0_19] : memref<1x128xf32, #tpu.memory_space<vmem>>, vector<1x128xf32>
      %79 = vector.broadcast %78 : vector<1x128xf32> to vector<8x128xf32>
      %80 = arith.addf %77, %79 : vector<8x128xf32>
      %cst_20 = arith.constant 0.000000e+00 : f32
      %81 = vector.broadcast %cst_20 : f32 to vector<8x128xf32>
      %82 = arith.maximumf %80, %81 : vector<8x128xf32>
      %83 = arith.truncf %82 : vector<8x128xf32> to vector<8x128xbf16>
      %c0_21 = arith.constant 0 : index
      %c0_22 = arith.constant 0 : index
      %84 = vector.load %arg7[%c0_21, %c0_22] : memref<128x128xbf16, #tpu.memory_space<vmem>>, vector<128x128xbf16>
      %cst_23 = arith.constant dense<0.000000e+00> : vector<8x128xf32>
      %85 = tpu.matmul %83, %84, %cst_23 {dimension_numbers = #tpu.dot_dimension_numbers<[1], [0], [0], [1], [0, 0, 1, 1], [], []>} : vector<8x128xbf16>, vector<128x128xbf16>, vector<8x128xf32> -> vector<8x128xf32>
      %c0_24 = arith.constant 0 : index
      %c0_25 = arith.constant 0 : index
      %86 = vector.load %arg8[%c0_24, %c0_25] : memref<1x128xf32, #tpu.memory_space<vmem>>, vector<1x128xf32>
      %87 = vector.broadcast %86 : vector<1x128xf32> to vector<8x128xf32>
      %88 = arith.addf %85, %87 : vector<8x128xf32>
      %c0_26 = arith.constant 0 : index
      %c0_27 = arith.constant 0 : index
      %89 = vector.load %arg9[%c0_26, %c0_27] : memref<8x128xf32, #tpu.memory_space<vmem>>, vector<8x128xf32>
      tpu.vector_store %arg9[%c0_26, %c0_27], %88 {strides = array<i32>} : memref<8x128xf32, #tpu.memory_space<vmem>>, vector<8x128xf32>,
    } else {
    }
    return
  }
  func.func @transform_0(%arg0: i32, %arg1: i32, %arg2: memref<1xi32, #tpu.memory_space<smem>>) -> (i32, i32) {
    %c0_i32 = arith.constant 0 : i32
    %c0_i32_0 = arith.constant 0 : i32
    return %arg0, %c0_i32 : i32, i32
  }
  func.func @transform_1(%arg0: i32, %arg1: i32, %arg2: memref<1xi32, #tpu.memory_space<smem>>) -> (i32, i32) {
    %0 = arith.index_cast %arg1 : i32 to index
    %1 = memref.load %arg2[%0] : memref<1xi32, #tpu.memory_space<smem>>
    %c0_i32 = arith.constant 0 : i32
    %c0_i32_0 = arith.constant 0 : i32
    return %1, %c0_i32 : i32, i32
  }
  func.func @transform_2(%arg0: i32, %arg1: i32, %arg2: memref<1xi32, #tpu.memory_space<smem>>) -> (i32, i32) {
    %c0_i32 = arith.constant 0 : i32
    %c0_i32_0 = arith.constant 0 : i32
    %c0_i32_1 = arith.constant 0 : i32
    return %c0_i32, %c0_i32_0 : i32, i32
  }
  func.func @transform_3(%arg0: i32, %arg1: i32, %arg2: memref<1xi32, #tpu.memory_space<smem>>) -> (i32, i32) {
    %c0_i32 = arith.constant 0 : i32
    %c0_i32_0 = arith.constant 0 : i32
    %c0_i32_1 = arith.constant 0 : i32
    return %c0_i32, %c0_i32_0 : i32, i32
  }
  func.func @transform_4(%arg0: i32, %arg1: i32, %arg2: memref<1xi32, #tpu.memory_space<smem>>) -> (i32, i32) {
    %c0_i32 = arith.constant 0 : i32
    %c0_i32_0 = arith.constant 0 : i32
    %c0_i32_1 = arith.constant 0 : i32
    return %c0_i32, %c0_i32_0 : i32, i32
  }
  func.func @transform_5(%arg0: i32, %arg1: i32, %arg2: memref<1xi32, #tpu.memory_space<smem>>) -> (i32, i32) {
    %c0_i32 = arith.constant 0 : i32
    %c0_i32_0 = arith.constant 0 : i32
    %c0_i32_1 = arith.constant 0 : i32
    return %c0_i32, %c0_i32_0 : i32, i32
  }
  func.func @transform_6(%arg0: i32, %arg1: i32, %arg2: memref<1xi32, #tpu.memory_space<smem>>) -> (i32, i32) {
    %c0_i32 = arith.constant 0 : i32
    %c0_i32_0 = arith.constant 0 : i32
    return %arg0, %c0_i32 : i32, i32
  }
}

</mosaic_0001>

<llo_original>
// kernel: ne.0
$region0: #{ne.0}
  #allocation2 [shape = 's32[1]{0}', space=sflag, size = 0x4, scoped, tag = 'scoped memory for ne.0']
  %s0 = inlined_call_operand.<no memory space> [shape: s32[], index: 0, kind: input, shape index: {}]
  %s1 = inlined_call_operand.hbm [shape: s32[32], index: 1, kind: output, shape index: {}]
  %v2 = vstv %s0
  $region1: #{ne.0} parent=0
    #allocation0 [shape = 'u8[512]{0}', space=vmem, size = 0x400, scoped, tag = 'operand span for operand 1']
    #allocation1 [shape = 's32[1]{0}', space=sflag, size = 0x4, scoped, tag = 'scoped memory for ne.0']
    %3 = vsyncpa [#allocation1], 0
    %4 = vst [vmem:[#allocation0] sm:$0x1] %v2
    %s6 = ssub.s32 16, 16
    %7 = vsyncadd [#allocation1], %s6
    %s9 = sshll.u32 [#allocation0], 4
    %s10 = int_to_ptr.vmem [resolvable:$true] %s9
    %12 = dma.vmem_to_hbm [thread:$0]  %s10, 16, %s1, [#allocation1]
    %13 = dma.done [#allocation1], 16
    %14 = vsyncpa [#allocation1], 1

// kernel: emonet_forward.1
$region0: #{emonet_forward.1}
  #allocation0 [shape = 'u32[]', space=smem, size = 0x4, offset = 0x4, fixed_abs, tag = 'smem constant byte address 0x4 - core index']
  #allocation1 [shape = 'u32[144,128]{1,0:T(1,128)}', space=vmem, size = 0x12000, scoped, tag = 'internal scratch']
  #allocation2 [shape = 'f32[8,128]{1,0:T(8,128)}', space=vmem, size = 0x1000, scoped, tag = 'scratch operand']
  #allocation3 [shape = 's32[1]{0}', space=sflag, size = 0x4, scoped, tag = 'scoped memory for emonet_forward.1']
  #allocation4 [shape = 's32[1]{0:T(128)S(6)}', space=smem, size = 0x200, scoped, tag = 'prefetched SMEM operand 0']
  %s0 = inlined_call_operand.<no memory space> [shape: s32[1], index: 0, kind: input, shape index: {}]
  %s1 = inlined_call_operand.vmem [shape: s32[8,8], index: 1, kind: input, shape index: {}]
  %s2 = inlined_call_operand.vmem [shape: bf16[256,128], index: 2, kind: input, shape index: {}]
  %s3 = inlined_call_operand.vmem [shape: bf16[128,128], index: 3, kind: input, shape index: {}]
  %s4 = inlined_call_operand.vmem [shape: f32[1,128], index: 4, kind: input, shape index: {}]
  %s5 = inlined_call_operand.vmem [shape: bf16[128,128], index: 5, kind: input, shape index: {}]
  %s6 = inlined_call_operand.vmem [shape: f32[1,128], index: 6, kind: input, shape index: {}]
  %s7 = inlined_call_operand.vmem [shape: f32[8,128], index: 7, kind: output, shape index: {}]
  %s8 = sld [smem:[#allocation0]]
  $region42: #{emonet_forward.1} parent=0
    _
  %s10 = ssub.s32 1, %s8
  %s11 = scalar_select 0, %s10, %s8
  %12 = sst [smem:[#allocation4]] %s0
  // Predicated region
  $region2: #{emonet_forward.1} parent=0 // pred_check
    _
  $region3: #{emonet_forward.1} parent=0 // pred_check_branch
    %14 = sbr.rel (0) target = $region5
  $region4: #{emonet_forward.1} parent=0 // pred_region
    _
  $region5: #{emonet_forward.1} parent=0 // pred_fallthru
    _
  // Predicated region
  $region6: #{emonet_forward.1} parent=0 // pred_check
    _
  $region7: #{emonet_forward.1} parent=0 // pred_check_branch
    %16 = sbr.rel (0) target = $region9
  $region8: #{emonet_forward.1} parent=0 // pred_region
    %s17 = sld [smem:[#allocation4]]
    %s18 = smul.u32 16, %s17
    %p19 = scmp.lt.s32.totalorder %s18, 31
    %s20 = scalar_select %p19, %s18, 31
    %s21 = smul.addr %s20, 4
    %s22 = scalar_lea.vmem %s2, %s21
    %s23 = sld [smem:[#allocation4]]
    %s24 = smul.u32 16, %s23
  $region9: #{emonet_forward.1} parent=0 // pred_fallthru
    _
  // Predicated region
  $region10: #{emonet_forward.1} parent=0 // pred_check
    _
  $region11: #{emonet_forward.1} parent=0 // pred_check_branch
    %26 = sbr.rel (0) target = $region13
  $region12: #{emonet_forward.1} parent=0 // pred_region
    _
  $region13: #{emonet_forward.1} parent=0 // pred_fallthru
    _
  // Predicated region
  $region14: #{emonet_forward.1} parent=0 // pred_check
    _
  $region15: #{emonet_forward.1} parent=0 // pred_check_branch
    %28 = sbr.rel (0) target = $region17
  $region16: #{emonet_forward.1} parent=0 // pred_region
    _
  $region17: #{emonet_forward.1} parent=0 // pred_fallthru
    _
  // Predicated region
  $region18: #{emonet_forward.1} parent=0 // pred_check
    _
  $region19: #{emonet_forward.1} parent=0 // pred_check_branch
    %30 = sbr.rel (0) target = $region21
  $region20: #{emonet_forward.1} parent=0 // pred_region
    _
  $region21: #{emonet_forward.1} parent=0 // pred_fallthru
    _
  // Predicated region
  $region22: #{emonet_forward.1} parent=0 // pred_check
    _
  $region23: #{emonet_forward.1} parent=0 // pred_check_branch
    %32 = sbr.rel (0) target = $region25
  $region24: #{emonet_forward.1} parent=0 // pred_region
    _
  $region25: #{emonet_forward.1} parent=0 // pred_fallthru
    _
  %s33 = sld [smem:[#allocation4]]
  %s34 = smul.u32 16, %s33
  %p35 = scmp.lt.s32.totalorder %s34, 31
  %s36 = scalar_select %p35, %s34, 31
  %s37 = smul.addr %s36, 4
  %s38 = scalar_lea.vmem %s2, %s37
  %s39 = sld [smem:[#allocation4]]
  %s40 = smul.u32 16, %s39
  %p41 = scmp.lt.s32.totalorder %s40, 31
  %s42 = scalar_select %p41, %s40, 31
  %s43 = smul.addr %s42, 4
  %s44 = scalar_lea.vmem %s2, %s43
  %s45 = sld [smem:[#allocation4]]
  %s46 = smul.u32 16, %s45
  %p48 = scmp.eq.s32.totalorder 0, 0
  // Predicated region
  $region26: #{emonet_forward.1} parent=0 // pred_check
    %p49 = pneg %p48
  $region27: #{emonet_forward.1} parent=0 // pred_check_branch
    %51 = sbr.rel (%p49) target = $region29
  $region28: #{emonet_forward.1} parent=0 // pred_region
    %52 = vst [vmem:[#allocation2] sm:$0xff] 0.0
  $region29: #{emonet_forward.1} parent=0 // pred_fallthru
    _
  %v53 = vld [vmem:[%s1] sm:$0xff]
  %s54 = sld [smem:[#allocation4]]
  %s55 = smul.u32 %s54, 128
  %s56 = sadd.s32 %s55, 0
  %v57 = vlaneseq
  %v58 = vand.u32 %v57, 127
  %v59 = vstv %s56
  %v60 = vadd.s32 %v59, %v58
  %61 = vset.pattern.permute.xlu0 0
  %62 = vperm.xlu0 %61, %v53
  %v63 = vpop.permute.xlu0 %62
  %vm64 = vcmp.eq.s32.totalorder %v63, %v60
  %v65 = vsel %vm64, 1, 0
  %66 = vset.pattern.permute.xlu0 1
  %67 = vperm.xlu0 %66, %v53
  %v68 = vpop.permute.xlu0 %67
  %vm69 = vcmp.eq.s32.totalorder %v68, %v60
  %v70 = vsel %vm69, 1, 0
  %v71 = vadd.s32 %v65, %v70
  %72 = vset.pattern.permute.xlu0 2
  %73 = vperm.xlu0 %72, %v53
  %v74 = vpop.permute.xlu0 %73
  %vm75 = vcmp.eq.s32.totalorder %v74, %v60
  %v76 = vsel %vm75, 1, 0
  %v77 = vadd.s32 %v71, %v76
  %78 = vset.pattern.permute.xlu0 3
  %79 = vperm.xlu0 %78, %v53
  %v80 = vpop.permute.xlu0 %79
  %vm81 = vcmp.eq.s32.totalorder %v80, %v60
  %v82 = vsel %vm81, 1, 0
  %v83 = vadd.s32 %v77, %v82
  %84 = vset.pattern.permute.xlu0 4
  %85 = vperm.xlu0 %84, %v53
  %v86 = vpop.permute.xlu0 %85
  %vm87 = vcmp.eq.s32.totalorder %v86, %v60
  %v88 = vsel %vm87, 1, 0
  %v89 = vadd.s32 %v83, %v88
  %90 = vset.pattern.permute.xlu0 5
  %91 = vperm.xlu0 %90, %v53
  %v92 = vpop.permute.xlu0 %91
  %vm93 = vcmp.eq.s32.totalorder %v92, %v60
  %v94 = vsel %vm93, 1, 0
  %v95 = vadd.s32 %v89, %v94
  %96 = vset.pattern.permute.xlu0 6
  %97 = vperm.xlu0 %96, %v53
  %v98 = vpop.permute.xlu0 %97
  %vm99 = vcmp.eq.s32.totalorder %v98, %v60
  %v100 = vsel %vm99, 1, 0
  %v101 = vadd.s32 %v95, %v100
  %102 = vset.pattern.permute.xlu0 7
  %103 = vperm.xlu0 %102, %v53
  %v104 = vpop.permute.xlu0 %103
  %vm105 = vcmp.eq.s32.totalorder %v104, %v60
  %v106 = vsel %vm105, 1, 0
  %v107 = vadd.s32 %v101, %v106
  %v108 = vld [vmem:[#allocation2] sm:$0xff]
  %v109 = vcvt.s32.f32 %v107
  %v110 = vpack.c.bf16 %v109, %v109
  %v111 = vld [vmem:[%s44] sm:$0xf]
  %v112 = vld [vmem:[%s44 + $0x4] sm:$0xf]
  %v113 = vld [vmem:[%s44 + $0x8] sm:$0xf]
  %v114 = vld [vmem:[%s44 + $0xc] sm:$0xf]
  %v115 = vld [vmem:[%s44 + $0x10] sm:$0xf]
  %v116 = vld [vmem:[%s44 + $0x14] sm:$0xf]
  %v117 = vld [vmem:[%s44 + $0x18] sm:$0xf]
  %v118 = vld [vmem:[%s44 + $0x1c] sm:$0xf]
  %v119 = vld [vmem:[%s44 + $0x20] sm:$0xf]
  %v120 = vld [vmem:[%s44 + $0x24] sm:$0xf]
  %v121 = vld [vmem:[%s44 + $0x28] sm:$0xf]
  %v122 = vld [vmem:[%s44 + $0x2c] sm:$0xf]
  %v123 = vld [vmem:[%s44 + $0x30] sm:$0xf]
  %v124 = vld [vmem:[%s44 + $0x34] sm:$0xf]
  %v125 = vld [vmem:[%s44 + $0x38] sm:$0xf]
  %v126 = vld [vmem:[%s44 + $0x3c] sm:$0xf]
  %v143 = vunpack.c.l.b16 %v111
  %v144 = vunpack.c.l.b16 %v112
  %v145 = vunpack.c.l.b16 %v113
  %v146 = vunpack.c.l.b16 %v114
  %v147 = vunpack.c.l.b16 %v115
  %v148 = vunpack.c.l.b16 %v116
  %v149 = vunpack.c.l.b16 %v117
  %v150 = vunpack.c.l.b16 %v118
  %v151 = vunpack.c.l.b16 %v119
  %v152 = vunpack.c.l.b16 %v120
  %v153 = vunpack.c.l.b16 %v121
  %v154 = vunpack.c.l.b16 %v122
  %v155 = vunpack.c.l.b16 %v123
  %v156 = vunpack.c.l.b16 %v124
  %v157 = vunpack.c.l.b16 %v125
  %v158 = vunpack.c.l.b16 %v126
  %v159 = vpack.c.b16 %v144, %v143
  %v160 = vpack.c.b16 %v146, %v145
  %v161 = vpack.c.b16 %v148, %v147
  %v162 = vpack.c.b16 %v150, %v149
  %v163 = vpack.c.b16 %v152, %v151
  %v164 = vpack.c.b16 %v154, %v153
  %v165 = vpack.c.b16 %v156, %v155
  %v166 = vpack.c.b16 %v158, %v157
  %175 = vmatprep.subr.bf16.mxu0 0
  %176 = vmatpush1.bf16.msra.mxu0 %v159
  %177 = vmatprep.subr.bf16.mxu0 0
  %178 = vmatpush1.bf16.msra.mxu0 %v160
  %179 = vmatprep.subr.bf16.mxu0 0
  %180 = vmatpush1.bf16.msra.mxu0 %v161
  %181 = vmatprep.subr.bf16.mxu0 0
  %182 = vmatpush1.bf16.msra.mxu0 %v162
  %183 = vmatprep.subr.bf16.mxu0 0
  %184 = vmatpush1.bf16.msra.mxu0 %v163
  %185 = vmatprep.subr.bf16.mxu0 0
  %186 = vmatpush1.bf16.msra.mxu0 %v164
  %187 = vmatprep.subr.bf16.mxu0 0
  %188 = vmatpush1.bf16.msra.mxu0 %v165
  %189 = vmatprep.subr.bf16.mxu0 0
  %190 = vmatpush1.bf16.msra.mxu0 %v166
  %191 = vmatprep.subr.bf16.mxu0 0
  %192 = vmatpush1.bf16.msra.mxu0 0
  %193 = vmatprep.subr.bf16.mxu0 0
  %194 = vmatpush1.bf16.msra.mxu0 0
  %195 = vmatprep.subr.bf16.mxu0 0
  %196 = vmatpush1.bf16.msra.mxu0 0
  %197 = vmatprep.subr.bf16.mxu0 0
  %198 = vmatpush1.bf16.msra.mxu0 0
  %199 = vmatprep.subr.bf16.mxu0 0
  %200 = vmatpush1.bf16.msra.mxu0 0
  %201 = vmatprep.subr.bf16.mxu0 0
  %202 = vmatpush1.bf16.msra.mxu0 0
  %203 = vmatprep.subr.bf16.mxu0 0
  %204 = vmatpush1.bf16.msra.mxu0 0
  %205 = vmatprep.subr.bf16.mxu0 0
  %206 = vmatpush1.bf16.msra.mxu0 0
  %207 = vmatprep.mubr.bf16.mxu0 0
  %208 = vmatmul.mubr.bf16.gmra.mrb[0].mxu0 %v110
  %v209 = vpop.f32.mrb[0].mxu0
  %v210 = vadd.f32 0.0, %v209
  %v211 = vpop.f32.mrb[0].mxu0
  %v212 = vpop.f32.mrb[0].mxu0
  %v213 = vpop.f32.mrb[0].mxu0
  %214 = vdwg.mxu0
  %v215 = vadd.f32 %v108, %v210
  %216 = vst [vmem:[#allocation2] sm:$0xff] %v215
  // Predicated region
  $region30: #{emonet_forward.1} parent=0 // pred_check
    %p217 = pneg %p48
  $region31: #{emonet_forward.1} parent=0 // pred_check_branch
    %219 = sbr.rel (%p217) target = $region33
  $region32: #{emonet_forward.1} parent=0 // pred_region
    %v220 = vld [vmem:[#allocation2] sm:$0xff]
    %v221 = vmul.f32 %v220, 0.125
    %v222 = vpack.c.bf16 %v221, %v221
    %v223 = vld [vmem:[%s3] sm:$0xf]
    %v224 = vld [vmem:[%s3 + $0x4] sm:$0xf]
    %v225 = vld [vmem:[%s3 + $0x8] sm:$0xf]
    %v226 = vld [vmem:[%s3 + $0xc] sm:$0xf]
    %v227 = vld [vmem:[%s3 + $0x10] sm:$0xf]
    %v228 = vld [vmem:[%s3 + $0x14] sm:$0xf]
    %v229 = vld [vmem:[%s3 + $0x18] sm:$0xf]
    %v230 = vld [vmem:[%s3 + $0x1c] sm:$0xf]
    %v231 = vld [vmem:[%s3 + $0x20] sm:$0xf]
    %v232 = vld [vmem:[%s3 + $0x24] sm:$0xf]
    %v233 = vld [vmem:[%s3 + $0x28] sm:$0xf]
    %v234 = vld [vmem:[%s3 + $0x2c] sm:$0xf]
    %v235 = vld [vmem:[%s3 + $0x30] sm:$0xf]
    %v236 = vld [vmem:[%s3 + $0x34] sm:$0xf]
    %v237 = vld [vmem:[%s3 + $0x38] sm:$0xf]
    %v238 = vld [vmem:[%s3 + $0x3c] sm:$0xf]
    %v239 = vld [vmem:[%s4] sm:$0x1]
    %v241 = vlaneseq
    %v242 = vshrl.u32 %v241, 7
    %v243 = vsub.s32 0, %v242
    %v244 = vrot.slane %v239, %v243
    %v262 = vunpack.c.l.b16 %v223
    %v263 = vunpack.c.l.b16 %v224
    %v264 = vunpack.c.l.b16 %v225
    %v265 = vunpack.c.l.b16 %v226
    %v266 = vunpack.c.l.b16 %v227
    %v267 = vunpack.c.l.b16 %v228
    %v268 = vunpack.c.l.b16 %v229
    %v269 = vunpack.c.l.b16 %v230
    %v270 = vunpack.c.l.b16 %v231
    %v271 = vunpack.c.l.b16 %v232
    %v272 = vunpack.c.l.b16 %v233
    %v273 = vunpack.c.l.b16 %v234
    %v274 = vunpack.c.l.b16 %v235
    %v275 = vunpack.c.l.b16 %v236
    %v276 = vunpack.c.l.b16 %v237
    %v277 = vunpack.c.l.b16 %v238
    %v278 = vpack.c.b16 %v263, %v262
    %v279 = vpack.c.b16 %v265, %v264
    %v280 = vpack.c.b16 %v267, %v266
    %v281 = vpack.c.b16 %v269, %v268
    %v282 = vpack.c.b16 %v271, %v270
    %v283 = vpack.c.b16 %v273, %v272
    %v284 = vpack.c.b16 %v275, %v274
    %v285 = vpack.c.b16 %v277, %v276
    %294 = vmatprep.subr.bf16.mxu0 0
    %295 = vmatpush1.bf16.msra.mxu0 %v278
    %296 = vmatprep.subr.bf16.mxu0 0
    %297 = vmatpush1.bf16.msra.mxu0 %v279
    %298 = vmatprep.subr.bf16.mxu0 0
    %299 = vmatpush1.bf16.msra.mxu0 %v280
    %300 = vmatprep.subr.bf16.mxu0 0
    %301 = vmatpush1.bf16.msra.mxu0 %v281
    %302 = vmatprep.subr.bf16.mxu0 0
    %303 = vmatpush1.bf16.msra.mxu0 %v282
    %304 = vmatprep.subr.bf16.mxu0 0
    %305 = vmatpush1.bf16.msra.mxu0 %v283
    %306 = vmatprep.subr.bf16.mxu0 0
    %307 = vmatpush1.bf16.msra.mxu0 %v284
    %308 = vmatprep.subr.bf16.mxu0 0
    %309 = vmatpush1.bf16.msra.mxu0 %v285
    %310 = vmatprep.subr.bf16.mxu0 0
    %311 = vmatpush1.bf16.msra.mxu0 0
    %312 = vmatprep.subr.bf16.mxu0 0
    %313 = vmatpush1.bf16.msra.mxu0 0
    %314 = vmatprep.subr.bf16.mxu0 0
    %315 = vmatpush1.bf16.msra.mxu0 0
    %316 = vmatprep.subr.bf16.mxu0 0
    %317 = vmatpush1.bf16.msra.mxu0 0
    %318 = vmatprep.subr.bf16.mxu0 0
    %319 = vmatpush1.bf16.msra.mxu0 0
    %320 = vmatprep.subr.bf16.mxu0 0
    %321 = vmatpush1.bf16.msra.mxu0 0
    %322 = vmatprep.subr.bf16.mxu0 0
    %323 = vmatpush1.bf16.msra.mxu0 0
    %324 = vmatprep.subr.bf16.mxu0 0
    %325 = vmatpush1.bf16.msra.mxu0 0
    %326 = vmatprep.mubr.bf16.mxu0 0
    %327 = vmatmul.mubr.bf16.gmra.mrb[0].mxu0 %v222
    %v328 = vpop.f32.mrb[0].mxu0
    %v329 = vadd.f32 %v244, %v328
    %v330 = vpop.f32.mrb[0].mxu0
    %v331 = vpop.f32.mrb[0].mxu0
    %v332 = vpop.f32.mrb[0].mxu0
    %333 = vdwg.mxu0
    %v334 = vmax.f32 %v329, 0.0
    %v335 = vpack.c.bf16 %v334, %v334
    %v336 = vld [vmem:[%s5] sm:$0xf]
    %v337 = vld [vmem:[%s5 + $0x4] sm:$0xf]
    %v338 = vld [vmem:[%s5 + $0x8] sm:$0xf]
    %v339 = vld [vmem:[%s5 + $0xc] sm:$0xf]
    %v340 = vld [vmem:[%s5 + $0x10] sm:$0xf]
    %v341 = vld [vmem:[%s5 + $0x14] sm:$0xf]
    %v342 = vld [vmem:[%s5 + $0x18] sm:$0xf]
    %v343 = vld [vmem:[%s5 + $0x1c] sm:$0xf]
    %v344 = vld [vmem:[%s5 + $0x20] sm:$0xf]
    %v345 = vld [vmem:[%s5 + $0x24] sm:$0xf]
    %v346 = vld [vmem:[%s5 + $0x28] sm:$0xf]
    %v347 = vld [vmem:[%s5 + $0x2c] sm:$0xf]
    %v348 = vld [vmem:[%s5 + $0x30] sm:$0xf]
    %v349 = vld [vmem:[%s5 + $0x34] sm:$0xf]
    %v350 = vld [vmem:[%s5 + $0x38] sm:$0xf]
    %v351 = vld [vmem:[%s5 + $0x3c] sm:$0xf]
    %v352 = vld [vmem:[%s6] sm:$0x1]
    %v354 = vlaneseq
    %v355 = vshrl.u32 %v354, 7
    %v356 = vsub.s32 0, %v355
    %v357 = vrot.slane %v352, %v356
    %v375 = vunpack.c.l.b16 %v336
    %v376 = vunpack.c.l.b16 %v337
    %v377 = vunpack.c.l.b16 %v338
    %v378 = vunpack.c.l.b16 %v339
    %v379 = vunpack.c.l.b16 %v340
    %v380 = vunpack.c.l.b16 %v341
    %v381 = vunpack.c.l.b16 %v342
    %v382 = vunpack.c.l.b16 %v343
    %v383 = vunpack.c.l.b16 %v344
    %v384 = vunpack.c.l.b16 %v345
    %v385 = vunpack.c.l.b16 %v346
    %v386 = vunpack.c.l.b16 %v347
    %v387 = vunpack.c.l.b16 %v348
    %v388 = vunpack.c.l.b16 %v349
    %v389 = vunpack.c.l.b16 %v350
    %v390 = vunpack.c.l.b16 %v351
    %v391 = vpack.c.b16 %v376, %v375
    %v392 = vpack.c.b16 %v378, %v377
    %v393 = vpack.c.b16 %v380, %v379
    %v394 = vpack.c.b16 %v382, %v381
    %v395 = vpack.c.b16 %v384, %v383
    %v396 = vpack.c.b16 %v386, %v385
    %v397 = vpack.c.b16 %v388, %v387
    %v398 = vpack.c.b16 %v390, %v389
    %407 = vmatprep.subr.bf16.mxu0 0
    %408 = vmatpush1.bf16.msra.mxu0 %v391
    %409 = vmatprep.subr.bf16.mxu0 0
    %410 = vmatpush1.bf16.msra.mxu0 %v392
    %411 = vmatprep.subr.bf16.mxu0 0
    %412 = vmatpush1.bf16.msra.mxu0 %v393
    %413 = vmatprep.subr.bf16.mxu0 0
    %414 = vmatpush1.bf16.msra.mxu0 %v394
    %415 = vmatprep.subr.bf16.mxu0 0
    %416 = vmatpush1.bf16.msra.mxu0 %v395
    %417 = vmatprep.subr.bf16.mxu0 0
    %418 = vmatpush1.bf16.msra.mxu0 %v396
    %419 = vmatprep.subr.bf16.mxu0 0
    %420 = vmatpush1.bf16.msra.mxu0 %v397
    %421 = vmatprep.subr.bf16.mxu0 0
    %422 = vmatpush1.bf16.msra.mxu0 %v398
    %423 = vmatprep.subr.bf16.mxu0 0
    %424 = vmatpush1.bf16.msra.mxu0 0
    %425 = vmatprep.subr.bf16.mxu0 0
    %426 = vmatpush1.bf16.msra.mxu0 0
    %427 = vmatprep.subr.bf16.mxu0 0
    %428 = vmatpush1.bf16.msra.mxu0 0
    %429 = vmatprep.subr.bf16.mxu0 0
    %430 = vmatpush1.bf16.msra.mxu0 0
    %431 = vmatprep.subr.bf16.mxu0 0
    %432 = vmatpush1.bf16.msra.mxu0 0
    %433 = vmatprep.subr.bf16.mxu0 0
    %434 = vmatpush1.bf16.msra.mxu0 0
    %435 = vmatprep.subr.bf16.mxu0 0
    %436 = vmatpush1.bf16.msra.mxu0 0
    %437 = vmatprep.subr.bf16.mxu0 0
    %438 = vmatpush1.bf16.msra.mxu0 0
    %439 = vmatprep.mubr.bf16.mxu0 0
    %440 = vmatmul.mubr.bf16.gmra.mrb[0].mxu0 %v335
    %v441 = vpop.f32.mrb[0].mxu0
    %v442 = vadd.f32 %v357, %v441
    %v443 = vpop.f32.mrb[0].mxu0
    %v444 = vpop.f32.mrb[0].mxu0
    %v445 = vpop.f32.mrb[0].mxu0
    %446 = vdwg.mxu0
    %447 = vst [vmem:[%s7] sm:$0xff] %v442
  $region33: #{emonet_forward.1} parent=0 // pred_fallthru
    _
  // Predicated region
  $region34: #{emonet_forward.1} parent=0 // pred_check
    _
  $region35: #{emonet_forward.1} parent=0 // pred_check_branch
    %449 = sbr.rel (0) target = $region37
  $region36: #{emonet_forward.1} parent=0 // pred_region
    _
  $region37: #{emonet_forward.1} parent=0 // pred_fallthru
    _
  // Predicated region
  $region38: #{emonet_forward.1} parent=0 // pred_check
    _
  $region39: #{emonet_forward.1} parent=0 // pred_check_branch
    %451 = sbr.rel (0) target = $region41
  $region40: #{emonet_forward.1} parent=0 // pred_region
    _
  $region41: #{emonet_forward.1} parent=0 // pred_fallthru
    _

</llo_original>
